<compile_context>
chip_gen: v7x
topology: tpu7x:2x2x1
jax: 0.10.0
libtpu: 0.0.40
codegen_flags: <defaults>
</compile_context>

<pallas_src>
import functools

import jax
import jax.numpy as jnp
from jax.experimental import pallas as pl
from jax.experimental.pallas import tpu as pltpu

LN_EPS = 1e-5  # torch.nn.LayerNorm default


def _round_up(x, n):
    return ((x + n - 1) // n) * n


def _vmem_capacity_bytes():
    try:
        return int(pltpu.get_tpu_info().vmem_capacity_bytes)
    except Exception:
        return 64 * 1024 * 1024  # conservative (v7x per-TC)


def _embed_kernel(x_ref, tr_ref, w_ref, p_ref, o_ref):
    """One row tile: Linear -> LayerNorm -> (+ t_r embedding). Dropout is identity (eval)."""
    # In-kernel f32 -> bf16 cast of the activations; MXU matmul with f32 accumulation.
    x = x_ref[...].astype(jnp.bfloat16)
    y = jnp.dot(x, w_ref[...], preferred_element_type=jnp.float32)      # (tm, E) f32

    bias = p_ref[0:1, :]
    gamma = p_ref[1:2, :]
    beta = p_ref[2:3, :]
    y = y + bias

    # Two-pass LayerNorm over the last axis (f32). Same number of XLU reductions as the
    # single-pass E[y^2]-E[y]^2 form, without catastrophic cancellation.
    inv_e = 1.0 / float(y.shape[-1])                                     # static Python constant
    mean = jnp.sum(y, axis=-1, keepdims=True) * inv_e
    centered = y - mean
    var = jnp.sum(centered * centered, axis=-1, keepdims=True) * inv_e
    y = centered * jax.lax.rsqrt(var + LN_EPS)
    y = y * gamma + beta

    # TODO(synk): torch.nn.Dropout(p=0.1) -- identity in eval mode, omitted.
    # Fused add of the (pre-gathered, bf16) t_r positional embeddings.
    o_ref[...] = (y + tr_ref[...].astype(jnp.float32)).astype(o_ref.dtype)


def _convert_t_rs_to_position_ids(t_rs, *, t_r_precision, t_r_max):
    """JAX port of BaseEmbedder.convert_t_rs_to_position_ids (no runtime assert on traced vals)."""
    num_t_r_embeddings = int(t_r_max / t_r_precision)            # matches torch-side Python math
    t_rs_rounded = jnp.round(t_rs / t_r_precision) * t_r_precision
    position_ids = (t_rs_rounded * int(1 / t_r_precision)).astype(jnp.int32)
    dummy_filler = jnp.full_like(position_ids, num_t_r_embeddings)
    return jnp.where(position_ids >= 0, position_ids, dummy_filler)


@functools.partial(jax.jit,
                   static_argnames=("t_r_precision", "t_r_max", "tm", "out_dtype"))
def base_embedder_forward(inputs, t_rs, w, bias, gamma, beta, wt_re,
                          *, t_r_precision=0.2, t_r_max=300, tm=512, out_dtype=None):
    """inputs: (B, S, in_dim), t_rs: (B, S) -> (B, S, embed_dim)."""
    b_sz, s_sz, in_dim = inputs.shape
    embed_dim = w.shape[1]
    m = b_sz * s_sz
    out_dt = jnp.dtype(inputs.dtype) if out_dtype is None else jnp.dtype(out_dtype)

    # Row tile: keep it a multiple of 8 (sublanes) and ensure the grid has >= 2 steps so the
    # "parallel" row axis actually shards across both TensorCores on v7x.
    tm_eff = max(8, min(int(tm), _round_up(pl.cdiv(m, 2), 8)))
    grid_m = pl.cdiv(m, tm_eff)                                   # ragged final block is masked

    # Flatten (free metadata reshape); keep native dtype, cast to bf16 inside the kernel.
    x2d = inputs.reshape(m, in_dim)

    # t_r embedding lookup (data-dependent gather) with XLA; gather output is bf16 so the
    # (m, E) intermediate stream is half-width. Its add is fused in-kernel.
    pos_ids = _convert_t_rs_to_position_ids(
        t_rs, t_r_precision=t_r_precision, t_r_max=t_r_max).reshape(m)
    tr2d = jnp.take(wt_re.astype(jnp.bfloat16), pos_ids, axis=0)         # (m, E) bf16

    # Grid-invariant operands: bf16 weights, packed (bias, gamma, beta) as one (3, E) f32 array.
    w_bf16 = w.astype(jnp.bfloat16)
    params = jnp.stack([bias, gamma, beta]).astype(jnp.float32)          # (3, E)

    # Accurate VMEM budget (double-buffered streams + grid-invariant buffers) with headroom,
    # capped at 80% of the actual chip capacity (v7x 64 MiB, v5e/v6e 128 MiB).
    x_bytes = jnp.dtype(inputs.dtype).itemsize
    vmem_est = (2 * tm_eff * in_dim * x_bytes          # x tiles (native dtype)
                + 2 * tm_eff * embed_dim * 2           # t_r tiles (bf16)
                + 2 * tm_eff * embed_dim * out_dt.itemsize  # out tiles
                + 2 * in_dim * embed_dim * 2           # resident W (bf16)
                + 2 * 3 * embed_dim * 4)               # packed bias/gamma/beta
    cap = _vmem_capacity_bytes()
    vmem_limit = int(min(int(0.8 * cap),
                         max(int(1.25 * vmem_est) + (1 << 20), 16 * 1024 * 1024)))

    out2d = pl.pallas_call(
        _embed_kernel,
        out_shape=jax.ShapeDtypeStruct((m, embed_dim), out_dt),
        grid_spec=pltpu.PrefetchScalarGridSpec(
            num_scalar_prefetch=0,
            grid=(grid_m,),
            in_specs=[
                pl.BlockSpec((tm_eff, in_dim), lambda i: (i, 0)),          # x rows (native dtype)
                pl.BlockSpec((tm_eff, embed_dim), lambda i: (i, 0)),       # gathered t_r embeds
                pl.BlockSpec((in_dim, embed_dim), lambda i: (0, 0)),       # W resident (bf16)
                pl.BlockSpec((3, embed_dim), lambda i: (0, 0)),            # bias/gamma/beta packed
            ],
            out_specs=pl.BlockSpec((tm_eff, embed_dim), lambda i: (i, 0)),
        ),
        compiler_params=pltpu.CompilerParams(
            dimension_semantics=("parallel",),
            vmem_limit_bytes=vmem_limit,
        ),
    )(x2d, tr2d, w_bf16, params)

    return out2d.reshape(b_sz, s_sz, embed_dim)


def init_params(key, in_dim, embed_dim, num_t_r_embeddings):
    """torch-default-style init: Linear U(-1/sqrt(in), +), LN gamma=1/beta=0, Embedding N(0,1)."""
    k_w, k_b, k_e = jax.random.split(key, 3)
    bound = 1.0 / jnp.sqrt(jnp.float32(in_dim))
    w = jax.random.uniform(k_w, (in_dim, embed_dim), jnp.float32, -bound, bound)   # (in, out)
    bias = jax.random.uniform(k_b, (embed_dim,), jnp.float32, -bound, bound)
    gamma = jnp.ones((embed_dim,), jnp.float32)
    beta = jnp.zeros((embed_dim,), jnp.float32)
    wt_re = jax.random.normal(k_e, (num_t_r_embeddings + 1, embed_dim), jnp.float32)
    return w, bias, gamma, beta, wt_re


if __name__ == "__main__":
    # Small shapes consistent with the module's (b, s, e) forward; embed_dim a multiple of 128
    # so output stores are lane-dense. m=16 -> tm auto-shrinks to 8 -> 2 grid steps (v7x: 2 TCs).
    B, S, IN_DIM, EMBED_DIM = 2, 8, 128, 256
    T_R_PRECISION, T_R_MAX = 0.2, 300
    NUM_T_R = int(T_R_MAX / T_R_PRECISION)

    key = jax.random.PRNGKey(0)
    k_x, k_t, k_p = jax.random.split(key, 3)
    x = jax.random.normal(k_x, (B, S, IN_DIM), jnp.float32)
    t_rs = jax.random.uniform(k_t, (B, S), jnp.float32, 0.0, float(T_R_MAX - 1))
    w, bias, gamma, beta, wt_re = init_params(k_p, IN_DIM, EMBED_DIM, NUM_T_R)

    out = base_embedder_forward(x, t_rs, w, bias, gamma, beta, wt_re,
                                t_r_precision=T_R_PRECISION, t_r_max=T_R_MAX, tm=512)
    out = jax.block_until_ready(out)

    # Pure-JAX reference of the same math (bf16 MXU operands / bf16 t_r embeds upcast to f32).
    x_bf = x.astype(jnp.bfloat16).astype(jnp.float32).reshape(-1, IN_DIM)
    w_bf = w.astype(jnp.bfloat16).astype(jnp.float32)
    y = x_bf @ w_bf + bias
    mu = y.mean(-1, keepdims=True)
    var = ((y - mu) ** 2).mean(-1, keepdims=True)
    ln = ((y - mu) / jnp.sqrt(var + LN_EPS)) * gamma + beta
    pos = _convert_t_rs_to_position_ids(t_rs, t_r_precision=T_R_PRECISION, t_r_max=T_R_MAX)
    tr_ref = wt_re.astype(jnp.bfloat16).astype(jnp.float32)[pos]
    ref = ln.reshape(B, S, EMBED_DIM) + tr_ref

    assert out.shape == (B, S, EMBED_DIM)
    assert jnp.allclose(out, ref, atol=2e-3, rtol=2e-3)

    print("KERNEL_OK")
</pallas_src>

<mosaic_0001>
module attributes {stable_mosaic.version = 11 : i64} {
  func.func @_embed_kernel(%arg0: i32, %arg1: memref<8x128xf32, #tpu.memory_space<vmem>>, %arg2: memref<8x256xbf16, #tpu.memory_space<vmem>>, %arg3: memref<128x256xbf16, #tpu.memory_space<vmem>>, %arg4: memref<3x256xf32, #tpu.memory_space<vmem>>, %arg5: memref<8x256xf32, #tpu.memory_space<vmem>>) attributes {dimension_semantics = [#tpu.dimension_semantics<parallel>], iteration_bounds = array<i64: 2>, scalar_prefetch = 0 : i64, scratch_operands = 0 : i64, tpu.core_type = #tpu.core_type<tc>, window_params = [{transform_indices = @transform_0, window_bounds = array<i64: 8, 128>}, {transform_indices = @transform_1, window_bounds = array<i64: 8, 256>}, {pipeline_mode = #tpu.pipeline_mode<synchronous>, transform_indices = @transform_2, window_bounds = array<i64: 128, 256>}, {pipeline_mode = #tpu.pipeline_mode<synchronous>, transform_indices = @transform_3, window_bounds = array<i64: 3, 256>}, {transform_indices = @transform_4, window_bounds = array<i64: 8, 256>}]} {
    %c0 = arith.constant 0 : index
    %c0_0 = arith.constant 0 : index
    %0 = vector.load %arg1[%c0, %c0_0] : memref<8x128xf32, #tpu.memory_space<vmem>>, vector<8x128xf32>
    %1 = arith.truncf %0 : vector<8x128xf32> to vector<8x128xbf16>
    %c0_1 = arith.constant 0 : index
    %c0_2 = arith.constant 0 : index
    %2 = vector.load %arg3[%c0_1, %c0_2] : memref<128x256xbf16, #tpu.memory_space<vmem>>, vector<128x256xbf16>
    %cst = arith.constant dense<0.000000e+00> : vector<8x256xf32>
    %3 = tpu.matmul %1, %2, %cst {dimension_numbers = #tpu.dot_dimension_numbers<[1], [0], [0], [1], [0, 0, 1, 1], [], []>} : vector<8x128xbf16>, vector<128x256xbf16>, vector<8x256xf32> -> vector<8x256xf32>
    %c0_3 = arith.constant 0 : index
    %c0_4 = arith.constant 0 : index
    %4 = vector.load %arg4[%c0_3, %c0_4] : memref<3x256xf32, #tpu.memory_space<vmem>>, vector<1x256xf32>
    %c1 = arith.constant 1 : index
    %c0_5 = arith.constant 0 : index
    %5 = vector.load %arg4[%c1, %c0_5] : memref<3x256xf32, #tpu.memory_space<vmem>>, vector<1x256xf32>
    %c2 = arith.constant 2 : index
    %c0_6 = arith.constant 0 : index
    %6 = vector.load %arg4[%c2, %c0_6] : memref<3x256xf32, #tpu.memory_space<vmem>>, vector<1x256xf32>
    %7 = vector.broadcast %4 : vector<1x256xf32> to vector<8x256xf32>
    %8 = arith.addf %3, %7 : vector<8x256xf32>
    %cst_7 = arith.constant dense<0.000000e+00> : vector<8xf32>
    %9 = vector.multi_reduction <add>, %8, %cst_7 [1] : vector<8x256xf32> to vector<8xf32>
    %10 = vector.shape_cast %9 : vector<8xf32> to vector<8x1xf32>
    %cst_8 = arith.constant 3.906250e-03 : f32
    %11 = vector.broadcast %cst_8 : f32 to vector<8x1xf32>
    %12 = arith.mulf %10, %11 : vector<8x1xf32>
    %13 = vector.broadcast %12 : vector<8x1xf32> to vector<8x256xf32>
    %14 = arith.subf %8, %13 : vector<8x256xf32>
    %15 = arith.mulf %14, %14 : vector<8x256xf32>
    %cst_9 = arith.constant dense<0.000000e+00> : vector<8xf32>
    %16 = vector.multi_reduction <add>, %15, %cst_9 [1] : vector<8x256xf32> to vector<8xf32>
    %17 = vector.shape_cast %16 : vector<8xf32> to vector<8x1xf32>
    %cst_10 = arith.constant 3.906250e-03 : f32
    %18 = vector.broadcast %cst_10 : f32 to vector<8x1xf32>
    %19 = arith.mulf %17, %18 : vector<8x1xf32>
    %cst_11 = arith.constant 9.99999974E-6 : f32
    %20 = vector.broadcast %cst_11 : f32 to vector<8x1xf32>
    %21 = arith.addf %19, %20 : vector<8x1xf32>
    %22 = math.rsqrt %21 : vector<8x1xf32>
    %23 = vector.broadcast %22 : vector<8x1xf32> to vector<8x256xf32>
    %24 = arith.mulf %14, %23 : vector<8x256xf32>
    %25 = vector.broadcast %5 : vector<1x256xf32> to vector<8x256xf32>
    %26 = arith.mulf %24, %25 : vector<8x256xf32>
    %27 = vector.broadcast %6 : vector<1x256xf32> to vector<8x256xf32>
    %28 = arith.addf %26, %27 : vector<8x256xf32>
    %c0_12 = arith.constant 0 : index
    %c0_13 = arith.constant 0 : index
    %29 = vector.load %arg2[%c0_12, %c0_13] : memref<8x256xbf16, #tpu.memory_space<vmem>>, vector<8x256xbf16>
    %30 = arith.extf %29 : vector<8x256xbf16> to vector<8x256xf32>
    %31 = arith.addf %28, %30 : vector<8x256xf32>
    %c0_14 = arith.constant 0 : index
    %c0_15 = arith.constant 0 : index
    %32 = vector.load %arg5[%c0_14, %c0_15] : memref<8x256xf32, #tpu.memory_space<vmem>>, vector<8x256xf32>
    tpu.vector_store %arg5[%c0_14, %c0_15], %31 {strides = array<i32>} : memref<8x256xf32, #tpu.memory_space<vmem>>, vector<8x256xf32>,
    return
  }
  func.func @transform_0(%arg0: i32) -> (i32, i32) {
    %c0_i32 = arith.constant 0 : i32
    %c0_i32_0 = arith.constant 0 : i32
    return %arg0, %c0_i32 : i32, i32
  }
  func.func @transform_1(%arg0: i32) -> (i32, i32) {
    %c0_i32 = arith.constant 0 : i32
    %c0_i32_0 = arith.constant 0 : i32
    return %arg0, %c0_i32 : i32, i32
  }
  func.func @transform_2(%arg0: i32) -> (i32, i32) {
    %c0_i32 = arith.constant 0 : i32
    %c0_i32_0 = arith.constant 0 : i32
    %c0_i32_1 = arith.constant 0 : i32
    return %c0_i32, %c0_i32_0 : i32, i32
  }
  func.func @transform_3(%arg0: i32) -> (i32, i32) {
    %c0_i32 = arith.constant 0 : i32
    %c0_i32_0 = arith.constant 0 : i32
    %c0_i32_1 = arith.constant 0 : i32
    return %c0_i32, %c0_i32_0 : i32, i32
  }
  func.func @transform_4(%arg0: i32) -> (i32, i32) {
    %c0_i32 = arith.constant 0 : i32
    %c0_i32_0 = arith.constant 0 : i32
    return %arg0, %c0_i32 : i32, i32
  }
}

</mosaic_0001>

<llo_original>
// kernel: base_embedder_forward.1
$region0: #{base_embedder_forward.1}
  #allocation0 [shape = 'u32[]', space=smem, size = 0x4, offset = 0x4, fixed_abs, tag = 'smem constant byte address 0x4 - core index']
  #allocation1 [shape = 'u32[144,128]{1,0:T(1,128)}', space=vmem, size = 0x12000, scoped, tag = 'internal scratch']
  %s0 = inlined_call_operand.vmem [shape: f32[16,128], index: 0, kind: input, shape index: {}]
  %s1 = inlined_call_operand.vmem [shape: bf16[16,256], index: 1, kind: input, shape index: {}]
  %s2 = inlined_call_operand.vmem [shape: bf16[128,256], index: 2, kind: input, shape index: {}]
  %s3 = inlined_call_operand.vmem [shape: f32[3,256], index: 3, kind: input, shape index: {}]
  %s4 = inlined_call_operand.hbm [shape: f32[16,256], index: 4, kind: output, shape index: {}]
  %s5 = sld [smem:[#allocation0]]
  $region49: #{base_embedder_forward.1} parent=0
    _
  %s7 = ssub.s32 1, %s5
  %s8 = scalar_select 0, %s7, %s5
  $region1: #{base_embedder_forward.1} parent=0
    #allocation2 [shape = 'u8[16384]{0}', space=vmem, size = 0x4000, scoped, tag = 'output window, operand 0']
    #allocation3 [shape = 's32[2]{0}', space=sflag, size = 0x8, scoped, tag = 'scoped memory for base_embedder_forward.1']
    %9 = vsyncpa [#allocation3], 0
    %s10 = scalar_lea.sflag [#allocation3], 1
    %11 = vsyncpa %s10, 0
    loop: start=0, step=1, limit=4
    $region2: #{base_embedder_forward.1} parent=1 // loop_pre_header
      _
    $region3: #{base_embedder_forward.1} parent=1 // loop_header
      %s13 = sphi 0, %s17
      %p14 = scmp.ge.s32.totalorder %s13, 4
      %s23 = sphi 0, %s25
      %s26 = sphi 0, %s23
      %s27 = sphi 0, %s26
      %s43 = sphi 0, %s27
      %s49 = sphi 0, %s51
      %s52 = sphi 0, %s49
      %s53 = sphi 0, %s52
      %s69 = sphi 0, %s53
      %s73 = sphi 0, %s73
      %s75 = sphi 0, %s73
      %s76 = sphi 0, %s75
      %s90 = sphi 0, %s76
      %s94 = sphi 0, %s94
      %s96 = sphi 0, %s94
      %s97 = sphi 0, %s96
      %s111 = sphi 0, %s97
      %s117 = sphi 0, %s119
      %s120 = sphi 0, %s117
      %s121 = sphi 0, %s120
      %s137 = sphi 0, %s121
    $region4: #{base_embedder_forward.1} parent=1 // loop_header_branch
      %16 = sbr.rel (%p14) target = $region8
    $region5: #{base_embedder_forward.1} parent=1 // loop_body
      %s18 = ssub.s32 %s13, 1
      %s19 = ssub.s32 %s13, 2
      %s20 = sadd.s32 %s13, 1
      %s21 = ssub.s32 %s13, %s20
      %p22 = scmp.eq.s32.totalorder %s21, 0
      %s24 = sadd.s32 %s23, 1
      %s25 = scalar_select %p22, %s23, %s24
      %p28 = pneg %p22
      %p29 = scmp.eq.s32.totalorder %s13, 1
      %p30 = por %p28, %p29
      %p31 = scmp.ne.s32.totalorder %s23, %s26
      %p32 = scmp.eq.s32.totalorder %s13, 0
      %p33 = por %p31, %p32
      %p34 = scmp.ne.s32.totalorder %s23, %s26
      %p35 = scmp.eq.s32.totalorder %s18, 1
      %p36 = por %p34, %p35
      %p37 = scmp.ne.s32.totalorder %s26, %s27
      %p38 = scmp.eq.s32.totalorder %s18, 0
      %p39 = por %p37, %p38
      %p40 = scmp.ne.s32.totalorder %s26, %s27
      %p41 = scmp.eq.s32.totalorder %s19, 1
      %p42 = por %p40, %p41
      %p44 = scmp.ne.s32.totalorder %s27, %s43
      %p45 = scmp.eq.s32.totalorder %s19, 0
      %p46 = por %p44, %p45
      %s47 = ssub.s32 %s13, %s20
      %p48 = scmp.eq.s32.totalorder %s47, 0
      %s50 = sadd.s32 %s49, 1
      %s51 = scalar_select %p48, %s49, %s50
      %p54 = pneg %p48
      %p55 = scmp.eq.s32.totalorder %s13, 1
      %p56 = por %p54, %p55
      %p57 = scmp.ne.s32.totalorder %s49, %s52
      %p58 = scmp.eq.s32.totalorder %s13, 0
      %p59 = por %p57, %p58
      %p60 = scmp.ne.s32.totalorder %s49, %s52
      %p61 = scmp.eq.s32.totalorder %s18, 1
      %p62 = por %p60, %p61
      %p63 = scmp.ne.s32.totalorder %s52, %s53
      %p64 = scmp.eq.s32.totalorder %s18, 0
      %p65 = por %p63, %p64
      %p66 = scmp.ne.s32.totalorder %s52, %s53
      %p67 = scmp.eq.s32.totalorder %s19, 1
      %p68 = por %p66, %p67
      %p70 = scmp.ne.s32.totalorder %s53, %s69
      %p71 = scmp.eq.s32.totalorder %s19, 0
      %p72 = por %p70, %p71
      %s74 = sadd.s32 %s73, 1
      %p77 = scmp.eq.s32.totalorder %s13, 1
      %p78 = scmp.ne.s32.totalorder %s73, %s75
      %p79 = scmp.eq.s32.totalorder %s13, 0
      %p80 = por %p78, %p79
      %p81 = scmp.ne.s32.totalorder %s73, %s75
      %p82 = scmp.eq.s32.totalorder %s18, 1
      %p83 = por %p81, %p82
      %p84 = scmp.ne.s32.totalorder %s75, %s76
      %p85 = scmp.eq.s32.totalorder %s18, 0
      %p86 = por %p84, %p85
      %p87 = scmp.ne.s32.totalorder %s75, %s76
      %p88 = scmp.eq.s32.totalorder %s19, 1
      %p89 = por %p87, %p88
      %p91 = scmp.ne.s32.totalorder %s76, %s90
      %p92 = scmp.eq.s32.totalorder %s19, 0
      %p93 = por %p91, %p92
      %s95 = sadd.s32 %s94, 1
      %p98 = scmp.eq.s32.totalorder %s13, 1
      %p99 = scmp.ne.s32.totalorder %s94, %s96
      %p100 = scmp.eq.s32.totalorder %s13, 0
      %p101 = por %p99, %p100
      %p102 = scmp.ne.s32.totalorder %s94, %s96
      %p103 = scmp.eq.s32.totalorder %s18, 1
      %p104 = por %p102, %p103
      %p105 = scmp.ne.s32.totalorder %s96, %s97
      %p106 = scmp.eq.s32.totalorder %s18, 0
      %p107 = por %p105, %p106
      %p108 = scmp.ne.s32.totalorder %s96, %s97
      %p109 = scmp.eq.s32.totalorder %s19, 1
      %p110 = por %p108, %p109
      %p112 = scmp.ne.s32.totalorder %s97, %s111
      %p113 = scmp.eq.s32.totalorder %s19, 0
      %p114 = por %p112, %p113
      %s115 = ssub.s32 %s13, %s20
      %p116 = scmp.eq.s32.totalorder %s115, 0
      %s118 = sadd.s32 %s117, 1
      %s119 = scalar_select %p116, %s117, %s118
      %p122 = pneg %p116
      %p123 = scmp.eq.s32.totalorder %s13, 1
      %p124 = por %p122, %p123
      %p125 = scmp.ne.s32.totalorder %s117, %s120
      %p126 = scmp.eq.s32.totalorder %s13, 0
      %p127 = por %p125, %p126
      %p128 = scmp.ne.s32.totalorder %s117, %s120
      %p129 = scmp.eq.s32.totalorder %s18, 1
      %p130 = por %p128, %p129
      %p131 = scmp.ne.s32.totalorder %s120, %s121
      %p132 = scmp.eq.s32.totalorder %s18, 0
      %p133 = por %p131, %p132
      %p134 = scmp.ne.s32.totalorder %s120, %s121
      %p135 = scmp.eq.s32.totalorder %s19, 1
      %p136 = por %p134, %p135
      %p138 = scmp.ne.s32.totalorder %s121, %s137
      %p139 = scmp.eq.s32.totalorder %s19, 0
      %p140 = por %p138, %p139
      %p141 = scmp.le.s32.totalorder 1, %s13
      %p142 = scmp.lt.s32.totalorder %s13, 3
      %p143 = pnand %p141, %p142
      %p144 = pneg %p143
      // Predicated region
      $region9: #{base_embedder_forward.1} parent=5 // pred_check
        _
      $region10: #{base_embedder_forward.1} parent=5 // pred_check_branch
        %146 = sbr.rel (%p143) target = $region12
      $region11: #{base_embedder_forward.1} parent=5 // pred_region
        %s147 = ssub.s32 %s13, 1
        // Predicated region
        $region13: #{base_embedder_forward.1} parent=11 // pred_check
          %p148 = pneg %p86
        $region14: #{base_embedder_forward.1} parent=11 // pred_check_branch
          %150 = sbr.rel (%p148) target = $region16
        $region15: #{base_embedder_forward.1} parent=11 // pred_region
          _
        $region16: #{base_embedder_forward.1} parent=11 // pred_fallthru
          _
        // Predicated region
        $region17: #{base_embedder_forward.1} parent=11 // pred_check
          %p151 = pneg %p107
        $region18: #{base_embedder_forward.1} parent=11 // pred_check_branch
          %153 = sbr.rel (%p151) target = $region20
        $region19: #{base_embedder_forward.1} parent=11 // pred_region
          _
        $region20: #{base_embedder_forward.1} parent=11 // pred_fallthru
          _
      $region12: #{base_embedder_forward.1} parent=5 // pred_fallthru
        _
      %p154 = scmp.lt.s32.totalorder %s13, 2
      // Predicated region
      $region21: #{base_embedder_forward.1} parent=5 // pred_check
        %p155 = pneg %p154
      $region22: #{base_embedder_forward.1} parent=5 // pred_check_branch
        %157 = sbr.rel (%p155) target = $region24
      $region23: #{base_embedder_forward.1} parent=5 // pred_region
        // Predicated region
        $region25: #{base_embedder_forward.1} parent=23 // pred_check
          %p158 = pneg %p33
        $region26: #{base_embedder_forward.1} parent=23 // pred_check_branch
          %160 = sbr.rel (%p158) target = $region28
        $region27: #{base_embedder_forward.1} parent=23 // pred_region
          %p161 = scmp.lt.s32.totalorder %s13, 1
          %s162 = scalar_select %p161, %s13, 1
          %s163 = smul.addr %s162, 8
          %s164 = scalar_lea.vmem %s0, %s163
        $region28: #{base_embedder_forward.1} parent=23 // pred_fallthru
          _
        // Predicated region
        $region29: #{base_embedder_forward.1} parent=23 // pred_check
          %p165 = pneg %p59
        $region30: #{base_embedder_forward.1} parent=23 // pred_check_branch
          %167 = sbr.rel (%p165) target = $region32
        $region31: #{base_embedder_forward.1} parent=23 // pred_region
          %p168 = scmp.lt.s32.totalorder %s13, 1
          %s169 = scalar_select %p168, %s13, 1
          %s170 = smul.addr %s169, 2
          %s171 = smul.addr %s170, 4
          %s172 = scalar_lea.vmem %s1, %s171
        $region32: #{base_embedder_forward.1} parent=23 // pred_fallthru
          _
      $region24: #{base_embedder_forward.1} parent=5 // pred_fallthru
        _
      %p173 = scmp.le.s32.totalorder 1, %s13
      %p174 = scmp.lt.s32.totalorder %s13, 3
      %p175 = pnand %p173, %p174
      %p176 = pneg %p175
      // Predicated region
      $region33: #{base_embedder_forward.1} parent=5 // pred_check
        _
      $region34: #{base_embedder_forward.1} parent=5 // pred_check_branch
        %178 = sbr.rel (%p175) target = $region36
      $region35: #{base_embedder_forward.1} parent=5 // pred_region
        %s179 = ssub.s32 %s13, 1
        %p180 = scmp.lt.s32.totalorder %s18, 1
        %s181 = scalar_select %p180, %s18, 1
        %s182 = smul.addr %s181, 8
        %s183 = scalar_lea.vmem %s0, %s182
        %p184 = pneg %p39
        %p185 = pneg %p36
        %p186 = scmp.lt.s32.totalorder %s18, 1
        %s187 = scalar_select %p186, %s18, 1
        %s188 = smul.addr %s187, 2
        %s189 = smul.addr %s188, 4
        %s190 = scalar_lea.vmem %s1, %s189
        %p191 = pneg %p65
        %p192 = pneg %p62
        %p193 = pneg %p86
        %p194 = pneg %p83
        %p195 = pneg %p107
        %p196 = pneg %p104
        %p197 = pneg %p133
        %p198 = pneg %p130
        %s199 = sand.u32 %s120, 1
        %s200 = scalar_lea.sflag [#allocation3], %s199
        %s201 = sand.u32 %s120, 1
        %s202 = smul.addr %s201, 16
        %s203 = scalar_lea.vmem [#allocation2], %s202
        %p204 = scmp.lt.s32.totalorder %s18, 1
        %s205 = scalar_select %p204, %s18, 1
        %s206 = smul.addr %s205, 8
        %s207 = scalar_lea.vmem %s0, %s206
        %p208 = scmp.lt.s32.totalorder %s18, 1
        %s209 = scalar_select %p208, %s18, 1
        %s210 = smul.addr %s209, 2
        %s211 = smul.addr %s210, 4
        %s212 = scalar_lea.vmem %s1, %s211
        %v214 = vld [vmem:[%s207] sm:$0xff]
        %v215 = vpack.c.bf16 %v214, %v214
        %v216 = vld [vmem:[%s2] sm:$0xff]
        %v217 = vld [vmem:[%s2 + $0x8] sm:$0xff]
        %v218 = vld [vmem:[%s2 + $0x10] sm:$0xff]
        %v219 = vld [vmem:[%s2 + $0x18] sm:$0xff]
        %v220 = vld [vmem:[%s2 + $0x20] sm:$0xff]
        %v221 = vld [vmem:[%s2 + $0x28] sm:$0xff]
        %v222 = vld [vmem:[%s2 + $0x30] sm:$0xff]
        %v223 = vld [vmem:[%s2 + $0x38] sm:$0xff]
        %v224 = vld [vmem:[%s2 + $0x40] sm:$0xff]
        %v225 = vld [vmem:[%s2 + $0x48] sm:$0xff]
        %v226 = vld [vmem:[%s2 + $0x50] sm:$0xff]
        %v227 = vld [vmem:[%s2 + $0x58] sm:$0xff]
        %v228 = vld [vmem:[%s2 + $0x60] sm:$0xff]
        %v229 = vld [vmem:[%s2 + $0x68] sm:$0xff]
        %v230 = vld [vmem:[%s2 + $0x70] sm:$0xff]
        %v231 = vld [vmem:[%s2 + $0x78] sm:$0xff]
        %v232 = vld [vmem:[%s3] ss:$4 sm:$0x3]
        %s233 = scalar_lea.vmem %s3, 1
        %v234 = vld [vmem:[%s233] ss:$4 sm:$0x3]
        %s235 = scalar_lea.vmem %s3, 2
        %v236 = vld [vmem:[%s235] ss:$4 sm:$0x3]
        %v238 = vlaneseq
        %v239 = vshrl.u32 %v238, 7
        %v240 = vsub.s32 0, %v239
        %v241 = vrot.slane %v232, %v240
        %v242 = vlaneseq
        %v243 = vshrl.u32 %v242, 7
        %v244 = vsub.s32 1, %v243
        %v245 = vrot.slane %v232, %v244
        %v264 = vunpack.c.l.b16 %v216
        %v265 = vunpack.c.h.b16 %v216
        %v266 = vunpack.c.l.b16 %v217
        %v267 = vunpack.c.h.b16 %v217
        %v268 = vunpack.c.l.b16 %v218
        %v269 = vunpack.c.h.b16 %v218
        %v270 = vunpack.c.l.b16 %v219
        %v271 = vunpack.c.h.b16 %v219
        %v272 = vunpack.c.l.b16 %v220
        %v273 = vunpack.c.h.b16 %v220
        %v274 = vunpack.c.l.b16 %v221
        %v275 = vunpack.c.h.b16 %v221
        %v276 = vunpack.c.l.b16 %v222
        %v277 = vunpack.c.h.b16 %v222
        %v278 = vunpack.c.l.b16 %v223
        %v279 = vunpack.c.h.b16 %v223
        %v280 = vunpack.c.l.b16 %v224
        %v281 = vunpack.c.h.b16 %v224
        %v282 = vunpack.c.l.b16 %v225
        %v283 = vunpack.c.h.b16 %v225
        %v284 = vunpack.c.l.b16 %v226
        %v285 = vunpack.c.h.b16 %v226
        %v286 = vunpack.c.l.b16 %v227
        %v287 = vunpack.c.h.b16 %v227
        %v288 = vunpack.c.l.b16 %v228
        %v289 = vunpack.c.h.b16 %v228
        %v290 = vunpack.c.l.b16 %v229
        %v291 = vunpack.c.h.b16 %v229
        %v292 = vunpack.c.l.b16 %v230
        %v293 = vunpack.c.h.b16 %v230
        %v294 = vunpack.c.l.b16 %v231
        %v295 = vunpack.c.h.b16 %v231
        %v296 = vpack.c.b16 %v266, %v264
        %v297 = vpack.c.b16 %v267, %v265
        %v298 = vpack.c.b16 %v270, %v268
        %v299 = vpack.c.b16 %v271, %v269
        %v300 = vpack.c.b16 %v274, %v272
        %v301 = vpack.c.b16 %v275, %v273
        %v302 = vpack.c.b16 %v278, %v276
        %v303 = vpack.c.b16 %v279, %v277
        %v304 = vpack.c.b16 %v282, %v280
        %v305 = vpack.c.b16 %v283, %v281
        %v306 = vpack.c.b16 %v286, %v284
        %v307 = vpack.c.b16 %v287, %v285
        %v308 = vpack.c.b16 %v290, %v288
        %v309 = vpack.c.b16 %v291, %v289
        %v310 = vpack.c.b16 %v294, %v292
        %v311 = vpack.c.b16 %v295, %v293
        %328 = vmatprep.subr.bf16.mxu0 %v297
        %329 = vmatpush1.bf16.msra.mxu0 %v296
        %330 = vmatprep.subr.bf16.mxu0 %v299
        %331 = vmatpush1.bf16.msra.mxu0 %v298
        %332 = vmatprep.subr.bf16.mxu0 %v301
        %333 = vmatpush1.bf16.msra.mxu0 %v300
        %334 = vmatprep.subr.bf16.mxu0 %v303
        %335 = vmatpush1.bf16.msra.mxu0 %v302
        %336 = vmatprep.subr.bf16.mxu0 %v305
        %337 = vmatpush1.bf16.msra.mxu0 %v304
        %338 = vmatprep.subr.bf16.mxu0 %v307
        %339 = vmatpush1.bf16.msra.mxu0 %v306
        %340 = vmatprep.subr.bf16.mxu0 %v309
        %341 = vmatpush1.bf16.msra.mxu0 %v308
        %342 = vmatprep.subr.bf16.mxu0 %v311
        %343 = vmatpush1.bf16.msra.mxu0 %v310
        %344 = vmatprep.subr.bf16.mxu0 0
        %345 = vmatpush1.bf16.msra.mxu0 0
        %346 = vmatprep.subr.bf16.mxu0 0
        %347 = vmatpush1.bf16.msra.mxu0 0
        %348 = vmatprep.subr.bf16.mxu0 0
        %349 = vmatpush1.bf16.msra.mxu0 0
        %350 = vmatprep.subr.bf16.mxu0 0
        %351 = vmatpush1.bf16.msra.mxu0 0
        %352 = vmatprep.subr.bf16.mxu0 0
        %353 = vmatpush1.bf16.msra.mxu0 0
        %354 = vmatprep.subr.bf16.mxu0 0
        %355 = vmatpush1.bf16.msra.mxu0 0
        %356 = vmatprep.subr.bf16.mxu0 0
        %357 = vmatpush1.bf16.msra.mxu0 0
        %358 = vmatprep.subr.bf16.mxu0 0
        %359 = vmatpush1.bf16.msra.mxu0 0
        %360 = vmatprep.mubr.bf16.mxu0 0
        %361 = vmatmul.mubr.bf16.gmra.mrb[0].mxu0 %v215
        %v362 = vpop.f32.mrb[0].mxu0
        %v363 = vadd.f32 %v241, %v362
        %v364 = vpop.f32.mrb[0].mxu0
        %v365 = vadd.f32 %v245, %v364
        %v366 = vpop.f32.mrb[0].mxu0
        %v367 = vpop.f32.mrb[0].mxu0
        %368 = vdwg.mxu0
        %v369 = vadd.f32 %v363, %v365
        %370 = vadd.xlane.f32.xlu0 %v369
        %v371 = vpop.xlane.xlu0 %370
        %v372 = vmul.f32 %v371, 0.00390625
        %v373 = vsub.f32 %v363, %v372
        %v374 = vsub.f32 %v365, %v372
        %v375 = vmul.f32 %v373, %v373
        %v376 = vmul.f32 %v374, %v374
        %v377 = vadd.f32 %v375, %v376
        %378 = vadd.xlane.f32.xlu0 %v377
        %v379 = vpop.xlane.xlu0 %378
        %v380 = vmul.f32 %v379, 0.00390625
        %v381 = vadd.f32 %v380, 1e-05
        %v382 = vrsqrt.pop %v381
        %v383 = vmul.f32 %v373, %v382
        %v384 = vmul.f32 %v374, %v382
        %v386 = vlaneseq
        %v387 = vshrl.u32 %v386, 7
        %v388 = vsub.s32 0, %v387
        %v389 = vrot.slane %v234, %v388
        %v390 = vlaneseq
        %v391 = vshrl.u32 %v390, 7
        %v392 = vsub.s32 1, %v391
        %v393 = vrot.slane %v234, %v392
        %v396 = vmul.f32 %v383, %v389
        %v397 = vmul.f32 %v384, %v393
        %v399 = vlaneseq
        %v400 = vshrl.u32 %v399, 7
        %v401 = vsub.s32 0, %v400
        %v402 = vrot.slane %v236, %v401
        %v403 = vlaneseq
        %v404 = vshrl.u32 %v403, 7
        %v405 = vsub.s32 1, %v404
        %v406 = vrot.slane %v236, %v405
        %v409 = vadd.f32 %v396, %v402
        %v410 = vadd.f32 %v397, %v406
        %v411 = vld [vmem:[%s212] sm:$0xff]
        %v412 = vunpack.c.l.bf16 %v411
        %v413 = vunpack.c.h.bf16 %v411
        %v414 = vadd.f32 %v409, %v412
        %v415 = vadd.f32 %v410, %v413
        %416 = vst [vmem:[%s203] sm:$0xff] %v414
        %417 = vst [vmem:[%s203 + $0x8] sm:$0xff] %v415
        %s418 = sand.u32 %s120, 1
        %s419 = scalar_lea.sflag [#allocation3], %s418
        %s420 = sand.u32 %s120, 1
        %s421 = smul.addr %s420, 16
        %s422 = scalar_lea.vmem [#allocation2], %s421
        // Predicated region
        $region37: #{base_embedder_forward.1} parent=35 // pred_check
          %p423 = pneg %p130
        $region38: #{base_embedder_forward.1} parent=35 // pred_check_branch
          %425 = sbr.rel (%p423) target = $region40
        $region39: #{base_embedder_forward.1} parent=35 // pred_region
          %s427 = ssub.s32 256, 256
          %428 = vsyncadd %s419, %s427
          %s429 = smul.addr %s18, 2
          %s430 = smul.addr %s429, 128
          %s431 = scalar_lea.hbm %s4, %s430
          %s433 = sshll.u32 %s422, 4
          %s434 = int_to_ptr.vmem [resolvable:$true] %s433
          %436 = dma.vmem_to_hbm [thread:$0]  %s434, 256, %s431, %s419
        $region40: #{base_embedder_forward.1} parent=35 // pred_fallthru
          _
      $region36: #{base_embedder_forward.1} parent=5 // pred_fallthru
        _
      %p437 = scmp.le.s32.totalorder 2, %s13
      // Predicated region
      $region41: #{base_embedder_forward.1} parent=5 // pred_check
        %p438 = pneg %p437
      $region42: #{base_embedder_forward.1} parent=5 // pred_check_branch
        %440 = sbr.rel (%p438) target = $region44
      $region43: #{base_embedder_forward.1} parent=5 // pred_region
        %s441 = ssub.s32 %s13, 2
        // Predicated region
        $region45: #{base_embedder_forward.1} parent=43 // pred_check
          %p442 = pneg %p136
        $region46: #{base_embedder_forward.1} parent=43 // pred_check_branch
          %444 = sbr.rel (%p442) target = $region48
        $region47: #{base_embedder_forward.1} parent=43 // pred_region
          %s445 = sand.u32 %s121, 1
          %s446 = scalar_lea.sflag [#allocation3], %s445
          %s447 = sand.u32 %s121, 1
          %s448 = smul.addr %s447, 16
          %s449 = scalar_lea.vmem [#allocation2], %s448
          %450 = dma.done %s446, 256
        $region48: #{base_embedder_forward.1} parent=43 // pred_fallthru
          _
      $region44: #{base_embedder_forward.1} parent=5 // pred_fallthru
        _
    $region6: #{base_embedder_forward.1} parent=1 // loop_footer
      %s17 = sadd.s32 1, %s13
    $region7: #{base_embedder_forward.1} parent=1 // loop_footer_branch
      %12 = sbr.rel target = $region3
    $region8: #{base_embedder_forward.1} parent=1 // loop_exit
      _
    %451 = vsyncpa [#allocation3], 1
    %s452 = scalar_lea.sflag [#allocation3], 1
    %453 = vsyncpa %s452, 1

</llo_original>
